<compile_context>
chip_gen: v7x
topology: tpu7x:2x2x1
jax: 0.10.0
libtpu: 0.0.40
codegen_flags: <defaults>
</compile_context>

<pallas_src>
import functools
import numpy as np
import jax
import jax.numpy as jnp
from jax.experimental import pallas as pl
from jax.experimental.pallas import tpu as pltpu

_VMEM_LIMIT = 32 * 1024 * 1024


def _cparams(semantics):
    return pltpu.CompilerParams(dimension_semantics=semantics,
                                vmem_limit_bytes=_VMEM_LIMIT)


def _full_spec(shape):
    nd = len(shape)
    return pl.BlockSpec(shape, lambda b, _n=nd: (0,) * _n)


# ---------------------------------------------------------------------------
# kernels
# ---------------------------------------------------------------------------
def head_kernel(x_ref, w1_ref, b1_ref, w2_ref, b2_ref,
                wl_ref, bl_ref, wr_ref, br_ref, out_ref):
    """Fused Linear -> Linear -> ConvTranspose(7,1,0) -> GLU.

    The ConvTranspose on a 1x1 spatial input is a plain matmul; its weight is
    split into GLU halves with columns ordered (kh, kw, channel) so the output
    is already NHWC-flat (B, 49*c0)."""
    x = x_ref[...].astype(jnp.bfloat16)
    t = jnp.dot(x, w1_ref[...], preferred_element_type=jnp.float32) + b1_ref[...]
    t = jnp.dot(t.astype(jnp.bfloat16), w2_ref[...],
                preferred_element_type=jnp.float32) + b2_ref[...]
    t = t.astype(jnp.bfloat16)
    left = jnp.dot(t, wl_ref[...], preferred_element_type=jnp.float32) + bl_ref[...]
    right = jnp.dot(t, wr_ref[...], preferred_element_type=jnp.float32) + br_ref[...]
    out_ref[...] = (left * jax.nn.sigmoid(right)).astype(out_ref.dtype)


def conv_up_kernel(h_ref, w_ref, y_ref, st_ref, *, H, W, C2):
    """Fused nearest-2x-upsample + conv3x3(pad=1), fractionally-strided form.

    Input: NHWC-flat activation (1, H*W, Cin) bf16 (pre-upsample resolution).
    Output parity planes: y[0, qy, qx, i*W+j, :] = conv(up(h))[2i+qy, 2j+qx, :]
    Each plane = sum over 2x2 folded taps of shift(h @ Wf)  (in-kernel im2col).
    Also emits per-channel (sum, sum_sq) partials for the two-pass BatchNorm.
    """
    M = H * W
    h = h_ref[0]                                                  # (M, Cin) bf16
    col = jax.lax.broadcasted_iota(jnp.int32, (M, 1), 0) % W      # output column j
    tot_sum = jnp.zeros((1, C2), jnp.float32)
    tot_sq = jnp.zeros((1, C2), jnp.float32)
    for qy in range(2):
        for qx in range(2):
            acc = jnp.zeros((M, C2), jnp.float32)
            for a in range(2):
                oy = a - 1 + qy                                   # source row offset
                for b in range(2):
                    ox = b - 1 + qx                               # source col offset
                    z = jnp.dot(h, w_ref[qy, qx, a, b],
                                preferred_element_type=jnp.float32)   # (M, C2)
                    s = oy * W + ox                               # flat row shift
                    if s > 0:
                        z = jnp.concatenate(
                            [z[s:, :], jnp.zeros((s, C2), jnp.float32)], axis=0)
                    elif s < 0:
                        z = jnp.concatenate(
                            [jnp.zeros((-s, C2), jnp.float32), z[:M + s, :]], axis=0)
                    if ox == -1:                                  # zero-pad columns
                        z = jnp.where(col >= 1, z, 0.0)
                    elif ox == 1:
                        z = jnp.where(col <= W - 2, z, 0.0)
                    acc = acc + z
            y_ref[0, qy, qx] = acc
            tot_sum = tot_sum + jnp.sum(acc, axis=0, keepdims=True)
            tot_sq = tot_sq + jnp.sum(acc * acc, axis=0, keepdims=True)
    st_ref[0] = jnp.concatenate([tot_sum, tot_sq], axis=0)        # (2, C2)


def bn_glu_kernel(y_ref, st_ref, g_ref, b_ref, out_ref, *, count, cout, eps):
    """Training-mode BatchNorm2d (global batch stats, biased var) + GLU."""
    st = jnp.sum(st_ref[...], axis=0)                 # (2, C2) global sums
    mean = st[0:1, :] / count
    var = st[1:2, :] / count - mean * mean
    scale = g_ref[...] * jax.lax.rsqrt(var + eps)
    shift = b_ref[...] - mean * scale
    for qy in range(2):
        for qx in range(2):
            v = y_ref[0, qy, qx] * scale + shift
            out_ref[0, qy, qx] = (
                v[:, :cout] * jax.nn.sigmoid(v[:, cout:])).astype(out_ref.dtype)


def bn_glu_mask_kernel(y_ref, st_ref, g_ref, b_ref, xt_ref, out_ref, *,
                       count, cout, eps, W, num_zeros, copy_k, mode, width_full):
    """Final stage: BatchNorm + GLU + sigmoid + a_1/a_2 masking, fused."""
    st = jnp.sum(st_ref[...], axis=0)
    mean = st[0:1, :] / count
    var = st[1:2, :] / count - mean * mean
    scale = g_ref[...] * jax.lax.rsqrt(var + eps)
    shift = b_ref[...] - mean * scale
    M = y_ref.shape[3]
    col = jax.lax.broadcasted_iota(jnp.int32, (M, 1), 0) % W
    for qy in range(2):
        for qx in range(2):
            v = y_ref[0, qy, qx] * scale + shift
            sig = jax.nn.sigmoid(v[:, :cout] * jax.nn.sigmoid(v[:, cout:]))
            x_pos = 2 * col + qx                          # true width coordinate
            if mode == 1:      # a_1: zero left half, paste right tail of x_true
                res = jnp.where(x_pos < num_zeros, 0.0, sig)
                if copy_k > 0:
                    res = jnp.where(x_pos >= width_full - copy_k,
                                    xt_ref[0, qy, qx], res)
            else:              # a_2: zero right half, paste left head of x_true
                res = jnp.where(x_pos >= num_zeros, 0.0, sig)
                if copy_k > 0:
                    res = jnp.where(x_pos < copy_k, xt_ref[0, qy, qx], res)
            out_ref[0, qy, qx] = res


# ---------------------------------------------------------------------------
# host-side parameter preparation
# ---------------------------------------------------------------------------
def _fold_upconv_weight(w_oihw):
    """torch conv weight (2Cout, Cin, 3, 3) -> folded (2,2,2,2,Cin,2Cout) bf16.

    Wf[qy, qx, a, b] multiplies h[i + (a-1+qy), j + (b-1+qx)] in the
    fractionally-strided decomposition of (nearest-2x upsample -> conv3x3)."""
    w = np.asarray(w_oihw, np.float32).transpose(2, 3, 1, 0)   # (3,3,Cin,2Cout)
    cin, c2 = w.shape[2], w.shape[3]
    wf = np.zeros((2, 2, 2, 2, cin, c2), np.float32)
    for qy in range(2):
        for qx in range(2):
            for dy in range(3):
                a = (qy + dy - 1) // 2 - (qy - 1)
                for dx in range(3):
                    b = (qx + dx - 1) // 2 - (qx - 1)
                    wf[qy, qx, a, b] += w[dy, dx]
    return jnp.asarray(wf, jnp.bfloat16)


class GeneratorMnistPallas:
    def __init__(self, key, channel=3, shape_img=32, n_hidden_1=2048, g_in=128, d=32):
        self.g_in = g_in
        self.channel = channel
        block_num = int(np.log2(shape_img) - 3)
        self.block_num = block_num
        c0 = d * (2 ** block_num)
        self.c0 = c0

        plan = [((2 ** (bn + 1)) * d, (2 ** bn) * d) for bn in reversed(range(block_num))]
        plan.append((d, channel))                       # deconv_out
        self.plan = plan

        keys = iter(jax.random.split(key, 6 + len(plan)))
        s = 0.05
        # master f32 copies (PyTorch-style layouts); also used by the reference
        p = {}
        p['w1'] = jax.random.normal(next(keys), (g_in, n_hidden_1), jnp.float32) * s
        p['b1'] = jax.random.normal(next(keys), (n_hidden_1,), jnp.float32) * s
        p['w2'] = jax.random.normal(next(keys), (n_hidden_1, g_in), jnp.float32) * s
        p['b2'] = jax.random.normal(next(keys), (g_in,), jnp.float32) * s
        p['wt0'] = jax.random.normal(next(keys), (g_in, 2 * c0, 7, 7), jnp.float32) * s
        p['bt0'] = jax.random.normal(next(keys), (2 * c0,), jnp.float32) * s
        p['convs'] = [jax.random.normal(next(keys), (2 * co, ci, 3, 3), jnp.float32) * s
                      for (ci, co) in plan]
        self.params = p

        # kernel-layout parameters (bf16 matmul operands, f32 biases/BN)
        self.w1 = p['w1'].astype(jnp.bfloat16)
        self.b1 = p['b1'][None, :]
        self.w2 = p['w2'].astype(jnp.bfloat16)
        self.b2 = p['b2'][None, :]
        wt = p['wt0']                                  # (g_in, 2c0, 7, 7)
        self.wt0_l = wt[:, :c0].transpose(0, 2, 3, 1).reshape(g_in, 49 * c0).astype(jnp.bfloat16)
        self.wt0_r = wt[:, c0:].transpose(0, 2, 3, 1).reshape(g_in, 49 * c0).astype(jnp.bfloat16)
        self.bt0_l = jnp.tile(p['bt0'][:c0], 49)[None, :]
        self.bt0_r = jnp.tile(p['bt0'][c0:], 49)[None, :]
        self.stages = []
        for (ci, co), w in zip(plan, p['convs']):
            self.stages.append(dict(cin=ci, cout=co,
                                    wf=_fold_upconv_weight(w),
                                    gamma=jnp.ones((1, 2 * co), jnp.float32),
                                    beta=jnp.zeros((1, 2 * co), jnp.float32)))

    def __call__(self, x, x_true, x_true_ratio, batch_size, iters):
        B = batch_size
        c0 = self.c0

        # ---- fused MLP head + ConvTranspose 7x7 + GLU -------------------------
        head_args = [x, self.w1, self.b1, self.w2, self.b2,
                     self.wt0_l, self.bt0_l, self.wt0_r, self.bt0_r]
        h = pl.pallas_call(
            head_kernel,
            out_shape=jax.ShapeDtypeStruct((B, 49 * c0), jnp.bfloat16),
            grid=(1,),
            in_specs=[_full_spec(a.shape) for a in head_args],
            out_specs=_full_spec((B, 49 * c0)),
            compiler_params=_cparams(("arbitrary",)),
        )(*head_args)
        h = h.reshape(B, 49, c0)          # NHWC-flat activation, 7x7 spatial
        Hs = Ws = 7

        n_stage = len(self.stages)
        for si, stg in enumerate(self.stages):
            cin, cout = stg['cin'], stg['cout']
            wf, gamma, beta = stg['wf'], stg['gamma'], stg['beta']
            C2 = 2 * cout
            M = Hs * Ws

            # (a) fused upsample + conv3x3, tiled over batch; partial BN stats out
            y, st = pl.pallas_call(
                functools.partial(conv_up_kernel, H=Hs, W=Ws, C2=C2),
                out_shape=(jax.ShapeDtypeStruct((B, 2, 2, M, C2), jnp.float32),
                           jax.ShapeDtypeStruct((B, 2, C2), jnp.float32)),
                grid=(B,),
                in_specs=[pl.BlockSpec((1, M, cin), lambda b: (b, 0, 0)),
                          pl.BlockSpec((2, 2, 2, 2, cin, C2),
                                       lambda b: (0, 0, 0, 0, 0, 0))],
                out_specs=(pl.BlockSpec((1, 2, 2, M, C2), lambda b: (b, 0, 0, 0, 0)),
                           pl.BlockSpec((1, 2, C2), lambda b: (b, 0, 0))),
                compiler_params=_cparams(("parallel",)),
            )(h, wf)
            count = float(B * 4 * M)      # N * (2H) * (2W) elements per channel

            last = (si == n_stage - 1)
            if not last:
                # (b) BatchNorm (global batch statistics) + GLU
                hp = pl.pallas_call(
                    functools.partial(bn_glu_kernel, count=count, cout=cout, eps=1e-5),
                    out_shape=jax.ShapeDtypeStruct((B, 2, 2, M, cout), jnp.bfloat16),
                    grid=(B,),
                    in_specs=[pl.BlockSpec((1, 2, 2, M, C2), lambda b: (b, 0, 0, 0, 0)),
                              pl.BlockSpec((B, 2, C2), lambda b: (0, 0, 0)),
                              pl.BlockSpec((1, C2), lambda b: (0, 0)),
                              pl.BlockSpec((1, C2), lambda b: (0, 0))],
                    out_specs=pl.BlockSpec((1, 2, 2, M, cout),
                                           lambda b: (b, 0, 0, 0, 0)),
                    compiler_params=_cparams(("parallel",)),
                )(y, st, gamma, beta)
                # parity planes -> standard NHWC-flat for the next conv stage
                h = hp.reshape(B, 2, 2, Hs, Ws, cout).transpose(0, 3, 1, 4, 2, 5)
                h = h.reshape(B, 4 * M, cout)
                Hs, Ws = 2 * Hs, 2 * Ws
            else:
                # (b') final stage: BN + GLU + sigmoid + a_1/a_2 masking, fused
                Hf, Wf = 2 * Hs, 2 * Ws
                width_full = int(x_true.shape[-1])
                assert width_full == Wf and x_true.shape[-2] == Hf
                assert x_true.shape[1] == cout
                num_zeros = width_full // 2
                mode = 1 if iters % 2 == 0 else 2
                if x_true_ratio != 0:
                    copy_k = int(num_zeros * x_true_ratio)
                    if mode == 1 and copy_k == 0:
                        copy_k = width_full     # PyTorch `[..., -0:]` = full width
                else:
                    copy_k = 0
                # x_true NCHW -> parity planes (B, 2, 2, M, C)
                xt = x_true.astype(jnp.float32).reshape(B, cout, Hs, 2, Ws, 2)
                xt = xt.transpose(0, 3, 5, 2, 4, 1).reshape(B, 2, 2, M, cout)
                outp = pl.pallas_call(
                    functools.partial(bn_glu_mask_kernel, count=count, cout=cout,
                                      eps=1e-5, W=Ws, num_zeros=num_zeros,
                                      copy_k=copy_k, mode=mode,
                                      width_full=width_full),
                    out_shape=jax.ShapeDtypeStruct((B, 2, 2, M, cout), jnp.float32),
                    grid=(B,),
                    in_specs=[pl.BlockSpec((1, 2, 2, M, C2), lambda b: (b, 0, 0, 0, 0)),
                              pl.BlockSpec((B, 2, C2), lambda b: (0, 0, 0)),
                              pl.BlockSpec((1, C2), lambda b: (0, 0)),
                              pl.BlockSpec((1, C2), lambda b: (0, 0)),
                              pl.BlockSpec((1, 2, 2, M, cout),
                                           lambda b: (b, 0, 0, 0, 0))],
                    out_specs=pl.BlockSpec((1, 2, 2, M, cout),
                                           lambda b: (b, 0, 0, 0, 0)),
                    compiler_params=_cparams(("parallel",)),
                )(y, st, gamma, beta, xt)
                # parity planes -> NCHW  (host XLA reorder; see module docstring)
                # TODO(synk): write the final result lane-dense as (B*C, H*W)
                # directly from the kernel once Mosaic reshapes allow it.
                out = outp.reshape(B, 2, 2, Hs, Ws, cout).transpose(0, 5, 3, 1, 4, 2)
                return out.reshape(B, cout, Hf, Wf)


# ---------------------------------------------------------------------------
# pure-JAX reference (f32), mirrors the PyTorch forward
# ---------------------------------------------------------------------------
def reference_forward(params, x, x_true, x_true_ratio, iters):
    t = x @ params['w1'] + params['b1']
    t = t @ params['w2'] + params['b2']
    y = jnp.einsum('bg,gokl->bokl', t, params['wt0']) \
        + params['bt0'][None, :, None, None]
    c = y.shape[1] // 2
    h = y[:, :c] * jax.nn.sigmoid(y[:, c:])
    for w in params['convs']:
        h = jnp.repeat(jnp.repeat(h, 2, axis=2), 2, axis=3)
        y = jax.lax.conv_general_dilated(h, w, (1, 1), 'SAME',
                                         dimension_numbers=('NCHW', 'OIHW', 'NCHW'))
        mean = jnp.mean(y, axis=(0, 2, 3), keepdims=True)
        var = jnp.mean((y - mean) ** 2, axis=(0, 2, 3), keepdims=True)
        y = (y - mean) * jax.lax.rsqrt(var + 1e-5)     # gamma=1, beta=0
        c = y.shape[1] // 2
        h = y[:, :c] * jax.nn.sigmoid(y[:, c:])
    out = jax.nn.sigmoid(h)
    width = x_true.shape[-1]
    num_zeros = width // 2
    xi = jnp.arange(width)[None, None, None, :]
    if iters % 2 == 0:
        out = jnp.where(xi < num_zeros, 0.0, out)
        if x_true_ratio != 0:
            k = int(num_zeros * x_true_ratio)
            if k == 0:
                k = width
            out = jnp.where(xi >= width - k, x_true, out)
    else:
        out = jnp.where(xi >= num_zeros, 0.0, out)
        if x_true_ratio != 0:
            k = int(num_zeros * x_true_ratio)
            if k > 0:
                out = jnp.where(xi < k, x_true, out)
    return out


# ---------------------------------------------------------------------------
if __name__ == "__main__":
    key = jax.random.PRNGKey(0)
    k_params, k_x, k_xt = jax.random.split(key, 3)

    # small config: channel=3, shape_img=16 -> block_num=1, spatial 7 -> 14 -> 28
    batch_size = 2
    gen = GeneratorMnistPallas(k_params, channel=3, shape_img=16,
                               n_hidden_1=64, g_in=32, d=8)

    x = jax.random.normal(k_x, (batch_size, 32), jnp.float32)
    x_true = jax.random.uniform(k_xt, (batch_size, 3, 28, 28), jnp.float32)  # NCHW

    out = gen(x, x_true, x_true_ratio=0.5, batch_size=batch_size, iters=0)
    out = jax.block_until_ready(out)
    assert out.shape == (batch_size, 3, 28, 28)
    assert out.dtype == jnp.float32

    ref = jax.block_until_ready(reference_forward(gen.params, x, x_true, 0.5, 0))
    print("max |pallas - reference| (iters=0): "
          f"{float(jnp.max(jnp.abs(out - ref))):.5f}  (bf16 MXU operands)")

    out2 = gen(x, x_true, x_true_ratio=0.0, batch_size=batch_size, iters=1)
    out2 = jax.block_until_ready(out2)
    assert out2.shape == (batch_size, 3, 28, 28)
    ref2 = jax.block_until_ready(reference_forward(gen.params, x, x_true, 0.0, 1))
    print("max |pallas - reference| (iters=1): "
          f"{float(jnp.max(jnp.abs(out2 - ref2))):.5f}")

    print("KERNEL_OK")
</pallas_src>

<mosaic_0001>
module attributes {stable_mosaic.version = 11 : i64} {
  func.func @head_kernel(%arg0: i32, %arg1: memref<2x32xf32, #tpu.memory_space<vmem>>, %arg2: memref<32x64xbf16, #tpu.memory_space<vmem>>, %arg3: memref<1x64xf32, #tpu.memory_space<vmem>>, %arg4: memref<64x32xbf16, #tpu.memory_space<vmem>>, %arg5: memref<1x32xf32, #tpu.memory_space<vmem>>, %arg6: memref<32x784xbf16, #tpu.memory_space<vmem>>, %arg7: memref<1x784xf32, #tpu.memory_space<vmem>>, %arg8: memref<32x784xbf16, #tpu.memory_space<vmem>>, %arg9: memref<1x784xf32, #tpu.memory_space<vmem>>, %arg10: memref<2x784xbf16, #tpu.memory_space<vmem>>) attributes {dimension_semantics = [#tpu.dimension_semantics<arbitrary>], iteration_bounds = array<i64: 1>, scalar_prefetch = 0 : i64, scratch_operands = 0 : i64, tpu.core_type = #tpu.core_type<tc>, window_params = [{pipeline_mode = #tpu.pipeline_mode<synchronous>, transform_indices = @transform_0, window_bounds = array<i64: 2, 32>}, {pipeline_mode = #tpu.pipeline_mode<synchronous>, transform_indices = @transform_1, window_bounds = array<i64: 32, 64>}, {pipeline_mode = #tpu.pipeline_mode<synchronous>, transform_indices = @transform_2, window_bounds = array<i64: 1, 64>}, {pipeline_mode = #tpu.pipeline_mode<synchronous>, transform_indices = @transform_3, window_bounds = array<i64: 64, 32>}, {pipeline_mode = #tpu.pipeline_mode<synchronous>, transform_indices = @transform_4, window_bounds = array<i64: 1, 32>}, {pipeline_mode = #tpu.pipeline_mode<synchronous>, transform_indices = @transform_5, window_bounds = array<i64: 32, 784>}, {pipeline_mode = #tpu.pipeline_mode<synchronous>, transform_indices = @transform_6, window_bounds = array<i64: 1, 784>}, {pipeline_mode = #tpu.pipeline_mode<synchronous>, transform_indices = @transform_7, window_bounds = array<i64: 32, 784>}, {pipeline_mode = #tpu.pipeline_mode<synchronous>, transform_indices = @transform_8, window_bounds = array<i64: 1, 784>}, {pipeline_mode = #tpu.pipeline_mode<synchronous>, transform_indices = @transform_9, window_bounds = array<i64: 2, 784>}]} {
    %c0 = arith.constant 0 : index
    %c0_0 = arith.constant 0 : index
    %0 = vector.load %arg1[%c0, %c0_0] : memref<2x32xf32, #tpu.memory_space<vmem>>, vector<2x32xf32>
    %1 = arith.truncf %0 : vector<2x32xf32> to vector<2x32xbf16>
    %c0_1 = arith.constant 0 : index
    %c0_2 = arith.constant 0 : index
    %2 = vector.load %arg2[%c0_1, %c0_2] : memref<32x64xbf16, #tpu.memory_space<vmem>>, vector<32x64xbf16>
    %cst = arith.constant dense<0.000000e+00> : vector<2x64xf32>
    %3 = tpu.matmul %1, %2, %cst {dimension_numbers = #tpu.dot_dimension_numbers<[1], [0], [0], [1], [0, 0, 1, 1], [], []>} : vector<2x32xbf16>, vector<32x64xbf16>, vector<2x64xf32> -> vector<2x64xf32>
    %c0_3 = arith.constant 0 : index
    %c0_4 = arith.constant 0 : index
    %4 = vector.load %arg3[%c0_3, %c0_4] : memref<1x64xf32, #tpu.memory_space<vmem>>, vector<1x64xf32>
    %5 = vector.broadcast %4 : vector<1x64xf32> to vector<2x64xf32>
    %6 = arith.addf %3, %5 : vector<2x64xf32>
    %7 = arith.truncf %6 : vector<2x64xf32> to vector<2x64xbf16>
    %c0_5 = arith.constant 0 : index
    %c0_6 = arith.constant 0 : index
    %8 = vector.load %arg4[%c0_5, %c0_6] : memref<64x32xbf16, #tpu.memory_space<vmem>>, vector<64x32xbf16>
    %cst_7 = arith.constant dense<0.000000e+00> : vector<2x32xf32>
    %9 = tpu.matmul %7, %8, %cst_7 {dimension_numbers = #tpu.dot_dimension_numbers<[1], [0], [0], [1], [0, 0, 1, 1], [], []>} : vector<2x64xbf16>, vector<64x32xbf16>, vector<2x32xf32> -> vector<2x32xf32>
    %c0_8 = arith.constant 0 : index
    %c0_9 = arith.constant 0 : index
    %10 = vector.load %arg5[%c0_8, %c0_9] : memref<1x32xf32, #tpu.memory_space<vmem>>, vector<1x32xf32>
    %11 = vector.broadcast %10 : vector<1x32xf32> to vector<2x32xf32>
    %12 = arith.addf %9, %11 : vector<2x32xf32>
    %13 = arith.truncf %12 : vector<2x32xf32> to vector<2x32xbf16>
    %c0_10 = arith.constant 0 : index
    %c0_11 = arith.constant 0 : index
    %14 = vector.load %arg6[%c0_10, %c0_11] : memref<32x784xbf16, #tpu.memory_space<vmem>>, vector<32x784xbf16>
    %cst_12 = arith.constant dense<0.000000e+00> : vector<2x784xf32>
    %15 = tpu.matmul %13, %14, %cst_12 {dimension_numbers = #tpu.dot_dimension_numbers<[1], [0], [0], [1], [0, 0, 1, 1], [], []>} : vector<2x32xbf16>, vector<32x784xbf16>, vector<2x784xf32> -> vector<2x784xf32>
    %c0_13 = arith.constant 0 : index
    %c0_14 = arith.constant 0 : index
    %16 = vector.load %arg7[%c0_13, %c0_14] : memref<1x784xf32, #tpu.memory_space<vmem>>, vector<1x784xf32>
    %17 = vector.broadcast %16 : vector<1x784xf32> to vector<2x784xf32>
    %18 = arith.addf %15, %17 : vector<2x784xf32>
    %c0_15 = arith.constant 0 : index
    %c0_16 = arith.constant 0 : index
    %19 = vector.load %arg8[%c0_15, %c0_16] : memref<32x784xbf16, #tpu.memory_space<vmem>>, vector<32x784xbf16>
    %cst_17 = arith.constant dense<0.000000e+00> : vector<2x784xf32>
    %20 = tpu.matmul %13, %19, %cst_17 {dimension_numbers = #tpu.dot_dimension_numbers<[1], [0], [0], [1], [0, 0, 1, 1], [], []>} : vector<2x32xbf16>, vector<32x784xbf16>, vector<2x784xf32> -> vector<2x784xf32>
    %c0_18 = arith.constant 0 : index
    %c0_19 = arith.constant 0 : index
    %21 = vector.load %arg9[%c0_18, %c0_19] : memref<1x784xf32, #tpu.memory_space<vmem>>, vector<1x784xf32>
    %22 = vector.broadcast %21 : vector<1x784xf32> to vector<2x784xf32>
    %23 = arith.addf %20, %22 : vector<2x784xf32>
    %24 = arith.negf %23 : vector<2x784xf32>
    %25 = math.exp %24 : vector<2x784xf32>
    %cst_20 = arith.constant 1.000000e+00 : f32
    %26 = vector.broadcast %cst_20 : f32 to vector<2x784xf32>
    %27 = arith.addf %26, %25 : vector<2x784xf32>
    %28 = arith.divf %26, %27 : vector<2x784xf32>
    %29 = arith.mulf %18, %28 : vector<2x784xf32>
    %30 = arith.truncf %29 : vector<2x784xf32> to vector<2x784xbf16>
    %c0_21 = arith.constant 0 : index
    %c0_22 = arith.constant 0 : index
    %31 = vector.load %arg10[%c0_21, %c0_22] : memref<2x784xbf16, #tpu.memory_space<vmem>>, vector<2x784xbf16>
    tpu.vector_store %arg10[%c0_21, %c0_22], %30 {strides = array<i32>} : memref<2x784xbf16, #tpu.memory_space<vmem>>, vector<2x784xbf16>,
    return
  }
  func.func @transform_0(%arg0: i32) -> (i32, i32) {
    %c0_i32 = arith.constant 0 : i32
    %c0_i32_0 = arith.constant 0 : i32
    %c0_i32_1 = arith.constant 0 : i32
    return %c0_i32, %c0_i32_0 : i32, i32
  }
  func.func @transform_1(%arg0: i32) -> (i32, i32) {
    %c0_i32 = arith.constant 0 : i32
    %c0_i32_0 = arith.constant 0 : i32
    %c0_i32_1 = arith.constant 0 : i32
    return %c0_i32, %c0_i32_0 : i32, i32
  }
  func.func @transform_2(%arg0: i32) -> (i32, i32) {
    %c0_i32 = arith.constant 0 : i32
    %c0_i32_0 = arith.constant 0 : i32
    %c0_i32_1 = arith.constant 0 : i32
    return %c0_i32, %c0_i32_0 : i32, i32
  }
  func.func @transform_3(%arg0: i32) -> (i32, i32) {
    %c0_i32 = arith.constant 0 : i32
    %c0_i32_0 = arith.constant 0 : i32
    %c0_i32_1 = arith.constant 0 : i32
    return %c0_i32, %c0_i32_0 : i32, i32
  }
  func.func @transform_4(%arg0: i32) -> (i32, i32) {
    %c0_i32 = arith.constant 0 : i32
    %c0_i32_0 = arith.constant 0 : i32
    %c0_i32_1 = arith.constant 0 : i32
    return %c0_i32, %c0_i32_0 : i32, i32
  }
  func.func @transform_5(%arg0: i32) -> (i32, i32) {
    %c0_i32 = arith.constant 0 : i32
    %c0_i32_0 = arith.constant 0 : i32
    %c0_i32_1 = arith.constant 0 : i32
    return %c0_i32, %c0_i32_0 : i32, i32
  }
  func.func @transform_6(%arg0: i32) -> (i32, i32) {
    %c0_i32 = arith.constant 0 : i32
    %c0_i32_0 = arith.constant 0 : i32
    %c0_i32_1 = arith.constant 0 : i32
    return %c0_i32, %c0_i32_0 : i32, i32
  }
  func.func @transform_7(%arg0: i32) -> (i32, i32) {
    %c0_i32 = arith.constant 0 : i32
    %c0_i32_0 = arith.constant 0 : i32
    %c0_i32_1 = arith.constant 0 : i32
    return %c0_i32, %c0_i32_0 : i32, i32
  }
  func.func @transform_8(%arg0: i32) -> (i32, i32) {
    %c0_i32 = arith.constant 0 : i32
    %c0_i32_0 = arith.constant 0 : i32
    %c0_i32_1 = arith.constant 0 : i32
    return %c0_i32, %c0_i32_0 : i32, i32
  }
  func.func @transform_9(%arg0: i32) -> (i32, i32) {
    %c0_i32 = arith.constant 0 : i32
    %c0_i32_0 = arith.constant 0 : i32
    %c0_i32_1 = arith.constant 0 : i32
    return %c0_i32, %c0_i32_0 : i32, i32
  }
}

</mosaic_0001>

<llo_original>
// kernel: tpu_custom_call.1
$region0: #{tpu_custom_call.1}
  #allocation0 [shape = 'u32[]', space=smem, size = 0x4, offset = 0x4, fixed_abs, tag = 'smem constant byte address 0x4 - core index']
  #allocation1 [shape = 'u32[144,128]{1,0:T(1,128)}', space=vmem, size = 0x12000, scoped, tag = 'internal scratch']
  %s0 = inlined_call_operand.vmem [shape: f32[2,32], index: 0, kind: input, shape index: {}]
  %s1 = inlined_call_operand.vmem [shape: bf16[32,64], index: 1, kind: input, shape index: {}]
  %s2 = inlined_call_operand.vmem [shape: f32[1,64], index: 2, kind: input, shape index: {}]
  %s3 = inlined_call_operand.vmem [shape: bf16[64,32], index: 3, kind: input, shape index: {}]
  %s4 = inlined_call_operand.vmem [shape: f32[1,32], index: 4, kind: input, shape index: {}]
  %s5 = inlined_call_operand.hbm [shape: bf16[32,784], index: 5, kind: input, shape index: {}]
  %s6 = inlined_call_operand.vmem [shape: f32[1,784], index: 6, kind: input, shape index: {}]
  %s7 = inlined_call_operand.hbm [shape: bf16[32,784], index: 7, kind: input, shape index: {}]
  %s8 = inlined_call_operand.vmem [shape: f32[1,784], index: 8, kind: input, shape index: {}]
  %s9 = inlined_call_operand.hbm [shape: bf16[2,784], index: 9, kind: output, shape index: {}]
  %s10 = sld [smem:[#allocation0]]
  $region54: #{tpu_custom_call.1} parent=0
    _
  %s12 = ssub.s32 1, %s10
  %s13 = scalar_select 0, %s12, %s10
  $region1: #{tpu_custom_call.1} parent=0
    #allocation2 [shape = 'u8[57344]{0}', space=vmem, size = 0xe000, scoped, tag = 'input window, operand 5, single buffered']
    #allocation3 [shape = 's32[1]{0}', space=sflag, size = 0x4, scoped, tag = 'scoped memory for tpu_custom_call.1']
    #allocation4 [shape = 's32[1]{0}', space=sflag, size = 0x4, scoped, tag = 'scoped memory for tpu_custom_call.1']
    #allocation5 [shape = 'u8[57344]{0}', space=vmem, size = 0xe000, scoped, tag = 'input window, operand 7, single buffered']
    #allocation6 [shape = 's32[1]{0}', space=sflag, size = 0x4, scoped, tag = 'scoped memory for tpu_custom_call.1']
    #allocation7 [shape = 'u8[3584]{0}', space=vmem, size = 0x1000, scoped, tag = 'output window, operand 0, single buffered']
    %14 = vsyncpa [#allocation3], 0
    %15 = vsyncpa [#allocation6], 0
    %16 = vsyncpa [#allocation4], 0
    // Predicated region
    $region2: #{tpu_custom_call.1} parent=1 // pred_check
      _
    $region3: #{tpu_custom_call.1} parent=1 // pred_check_branch
      %18 = sbr.rel (0) target = $region5
    $region4: #{tpu_custom_call.1} parent=1 // pred_region
      _
    $region5: #{tpu_custom_call.1} parent=1 // pred_fallthru
      _
    // Predicated region
    $region6: #{tpu_custom_call.1} parent=1 // pred_check
      _
    $region7: #{tpu_custom_call.1} parent=1 // pred_check_branch
      %20 = sbr.rel (0) target = $region9
    $region8: #{tpu_custom_call.1} parent=1 // pred_region
      _
    $region9: #{tpu_custom_call.1} parent=1 // pred_fallthru
      _
    // Predicated region
    $region10: #{tpu_custom_call.1} parent=1 // pred_check
      _
    $region11: #{tpu_custom_call.1} parent=1 // pred_check_branch
      %22 = sbr.rel (0) target = $region13
    $region12: #{tpu_custom_call.1} parent=1 // pred_region
      _
    $region13: #{tpu_custom_call.1} parent=1 // pred_fallthru
      _
    // Predicated region
    $region14: #{tpu_custom_call.1} parent=1 // pred_check
      _
    $region15: #{tpu_custom_call.1} parent=1 // pred_check_branch
      %24 = sbr.rel (0) target = $region17
    $region16: #{tpu_custom_call.1} parent=1 // pred_region
      _
    $region17: #{tpu_custom_call.1} parent=1 // pred_fallthru
      _
    // Predicated region
    $region18: #{tpu_custom_call.1} parent=1 // pred_check
      _
    $region19: #{tpu_custom_call.1} parent=1 // pred_check_branch
      %26 = sbr.rel (0) target = $region21
    $region20: #{tpu_custom_call.1} parent=1 // pred_region
      _
    $region21: #{tpu_custom_call.1} parent=1 // pred_fallthru
      _
    // Predicated region
    $region22: #{tpu_custom_call.1} parent=1 // pred_check
      _
    $region23: #{tpu_custom_call.1} parent=1 // pred_check_branch
      %28 = sbr.rel (0) target = $region25
    $region24: #{tpu_custom_call.1} parent=1 // pred_region
      %s30 = ssub.s32 1792, 1792
      %31 = vsyncadd [#allocation3], %s30
      %s32 = sshll.u32 [#allocation2], 4
      %s33 = int_to_ptr.vmem [resolvable:$true] %s32
      %38 = dma.hbm_to_vmem [thread:$0]  %s5, 1792, %s33, [#allocation3], 448, 448, 28
    $region25: #{tpu_custom_call.1} parent=1 // pred_fallthru
      _
    // Predicated region
    $region26: #{tpu_custom_call.1} parent=1 // pred_check
      _
    $region27: #{tpu_custom_call.1} parent=1 // pred_check_branch
      %40 = sbr.rel (0) target = $region29
    $region28: #{tpu_custom_call.1} parent=1 // pred_region
      _
    $region29: #{tpu_custom_call.1} parent=1 // pred_fallthru
      _
    // Predicated region
    $region30: #{tpu_custom_call.1} parent=1 // pred_check
      _
    $region31: #{tpu_custom_call.1} parent=1 // pred_check_branch
      %42 = sbr.rel (0) target = $region33
    $region32: #{tpu_custom_call.1} parent=1 // pred_region
      %s44 = ssub.s32 1792, 1792
      %45 = vsyncadd [#allocation6], %s44
      %s46 = sshll.u32 [#allocation5], 4
      %s47 = int_to_ptr.vmem [resolvable:$true] %s46
      %52 = dma.hbm_to_vmem [thread:$0]  %s7, 1792, %s47, [#allocation6], 448, 448, 28
    $region33: #{tpu_custom_call.1} parent=1 // pred_fallthru
      _
    // Predicated region
    $region34: #{tpu_custom_call.1} parent=1 // pred_check
      _
    $region35: #{tpu_custom_call.1} parent=1 // pred_check_branch
      %54 = sbr.rel (0) target = $region37
    $region36: #{tpu_custom_call.1} parent=1 // pred_region
      _
    $region37: #{tpu_custom_call.1} parent=1 // pred_fallthru
      _
    // Predicated region
    $region38: #{tpu_custom_call.1} parent=1 // pred_check
      _
    $region39: #{tpu_custom_call.1} parent=1 // pred_check_branch
      %56 = sbr.rel (0) target = $region41
    $region40: #{tpu_custom_call.1} parent=1 // pred_region
      %57 = dma.done [#allocation3], 1792
    $region41: #{tpu_custom_call.1} parent=1 // pred_fallthru
      _
    // Predicated region
    $region42: #{tpu_custom_call.1} parent=1 // pred_check
      _
    $region43: #{tpu_custom_call.1} parent=1 // pred_check_branch
      %59 = sbr.rel (0) target = $region45
    $region44: #{tpu_custom_call.1} parent=1 // pred_region
      %60 = dma.done [#allocation6], 1792
    $region45: #{tpu_custom_call.1} parent=1 // pred_fallthru
      _
    %v62 = vld [vmem:[%s0] sm:$0x3]
    %v63 = vpack.c.bf16 %v62, %v62
    %v64 = vld [vmem:[%s1] sm:$0xf]
    %v65 = vld [vmem:[%s1 + $0x4] sm:$0xf]
    %v66 = vld [vmem:[%s1 + $0x8] sm:$0xf]
    %v67 = vld [vmem:[%s1 + $0xc] sm:$0xf]
    %v68 = vld [vmem:[%s2] sm:$0x1]
    %v70 = vlaneseq
    %v71 = vshrl.u32 %v70, 7
    %v72 = vsub.s32 0, %v71
    %v73 = vrot.slane %v68, %v72
    %v79 = vunpack.c.l.b16 %v64
    %v80 = vunpack.c.l.b16 %v65
    %v81 = vunpack.c.l.b16 %v66
    %v82 = vunpack.c.l.b16 %v67
    %v83 = vpack.c.b16 %v80, %v79
    %v84 = vpack.c.b16 %v82, %v81
    %vm87 = vcmask 261120
    %v89 = vsel %vm87, %v63, 0
    %91 = vmatprep.subr.bf16.mxu0 0
    %92 = vmatpush1.bf16.msra.mxu0 %v83
    %93 = vmatprep.subr.bf16.mxu0 0
    %94 = vmatpush1.bf16.msra.mxu0 %v84
    %95 = vmatprep.subr.bf16.mxu0 0
    %96 = vmatpush1.bf16.msra.mxu0 0
    %97 = vmatprep.subr.bf16.mxu0 0
    %98 = vmatpush1.bf16.msra.mxu0 0
    %99 = vmatprep.subr.bf16.mxu0 0
    %100 = vmatpush1.bf16.msra.mxu0 0
    %101 = vmatprep.subr.bf16.mxu0 0
    %102 = vmatpush1.bf16.msra.mxu0 0
    %103 = vmatprep.subr.bf16.mxu0 0
    %104 = vmatpush1.bf16.msra.mxu0 0
    %105 = vmatprep.subr.bf16.mxu0 0
    %106 = vmatpush1.bf16.msra.mxu0 0
    %107 = vmatprep.subr.bf16.mxu0 0
    %108 = vmatpush1.bf16.msra.mxu0 0
    %109 = vmatprep.subr.bf16.mxu0 0
    %110 = vmatpush1.bf16.msra.mxu0 0
    %111 = vmatprep.subr.bf16.mxu0 0
    %112 = vmatpush1.bf16.msra.mxu0 0
    %113 = vmatprep.subr.bf16.mxu0 0
    %114 = vmatpush1.bf16.msra.mxu0 0
    %115 = vmatprep.subr.bf16.mxu0 0
    %116 = vmatpush1.bf16.msra.mxu0 0
    %117 = vmatprep.subr.bf16.mxu0 0
    %118 = vmatpush1.bf16.msra.mxu0 0
    %119 = vmatprep.subr.bf16.mxu0 0
    %120 = vmatpush1.bf16.msra.mxu0 0
    %121 = vmatprep.subr.bf16.mxu0 0
    %122 = vmatpush1.bf16.msra.mxu0 0
    %123 = vmatprep.mubr.bf16.mxu0 0
    %124 = vmatmul.mubr.bf16.gmra.mrb[0].mxu0 %v89
    %v125 = vpop.f32.mrb[0].mxu0
    %v126 = vadd.f32 %v73, %v125
    %v127 = vpop.f32.mrb[0].mxu0
    %v128 = vpop.f32.mrb[0].mxu0
    %v129 = vpop.f32.mrb[0].mxu0
    %130 = vdwg.mxu0
    %v131 = vpack.c.bf16 %v126, %v126
    %v132 = vld [vmem:[%s3] sm:$0xf]
    %v133 = vld [vmem:[%s3 + $0x4] sm:$0xf]
    %v134 = vld [vmem:[%s3 + $0x8] sm:$0xf]
    %v135 = vld [vmem:[%s3 + $0xc] sm:$0xf]
    %v136 = vld [vmem:[%s3 + $0x10] sm:$0xf]
    %v137 = vld [vmem:[%s3 + $0x14] sm:$0xf]
    %v138 = vld [vmem:[%s3 + $0x18] sm:$0xf]
    %v139 = vld [vmem:[%s3 + $0x1c] sm:$0xf]
    %v140 = vld [vmem:[%s4] sm:$0x1]
    %v142 = vlaneseq
    %v143 = vshrl.u32 %v142, 7
    %v144 = vsub.s32 0, %v143
    %v145 = vrot.slane %v140, %v144
    %v155 = vunpack.c.l.b16 %v132
    %v156 = vunpack.c.l.b16 %v133
    %v157 = vunpack.c.l.b16 %v134
    %v158 = vunpack.c.l.b16 %v135
    %v159 = vunpack.c.l.b16 %v136
    %v160 = vunpack.c.l.b16 %v137
    %v161 = vunpack.c.l.b16 %v138
    %v162 = vunpack.c.l.b16 %v139
    %v163 = vpack.c.b16 %v156, %v155
    %v164 = vpack.c.b16 %v158, %v157
    %v165 = vpack.c.b16 %v160, %v159
    %v166 = vpack.c.b16 %v162, %v161
    %vm171 = vcmask 523264
    %v173 = vsel %vm171, %v131, 0
    %175 = vmatprep.subr.bf16.mxu0 0
    %176 = vmatpush1.bf16.msra.mxu0 %v163
    %177 = vmatprep.subr.bf16.mxu0 0
    %178 = vmatpush1.bf16.msra.mxu0 %v164
    %179 = vmatprep.subr.bf16.mxu0 0
    %180 = vmatpush1.bf16.msra.mxu0 %v165
    %181 = vmatprep.subr.bf16.mxu0 0
    %182 = vmatpush1.bf16.msra.mxu0 %v166
    %183 = vmatprep.subr.bf16.mxu0 0
    %184 = vmatpush1.bf16.msra.mxu0 0
    %185 = vmatprep.subr.bf16.mxu0 0
    %186 = vmatpush1.bf16.msra.mxu0 0
    %187 = vmatprep.subr.bf16.mxu0 0
    %188 = vmatpush1.bf16.msra.mxu0 0
    %189 = vmatprep.subr.bf16.mxu0 0
    %190 = vmatpush1.bf16.msra.mxu0 0
    %191 = vmatprep.subr.bf16.mxu0 0
    %192 = vmatpush1.bf16.msra.mxu0 0
    %193 = vmatprep.subr.bf16.mxu0 0
    %194 = vmatpush1.bf16.msra.mxu0 0
    %195 = vmatprep.subr.bf16.mxu0 0
    %196 = vmatpush1.bf16.msra.mxu0 0
    %197 = vmatprep.subr.bf16.mxu0 0
    %198 = vmatpush1.bf16.msra.mxu0 0
    %199 = vmatprep.subr.bf16.mxu0 0
    %200 = vmatpush1.bf16.msra.mxu0 0
    %201 = vmatprep.subr.bf16.mxu0 0
    %202 = vmatpush1.bf16.msra.mxu0 0
    %203 = vmatprep.subr.bf16.mxu0 0
    %204 = vmatpush1.bf16.msra.mxu0 0
    %205 = vmatprep.subr.bf16.mxu0 0
    %206 = vmatpush1.bf16.msra.mxu0 0
    %207 = vmatprep.mubr.bf16.mxu0 0
    %208 = vmatmul.mubr.bf16.gmra.mrb[0].mxu0 %v173
    %v209 = vpop.f32.mrb[0].mxu0
    %v210 = vadd.f32 %v145, %v209
    %v211 = vpop.f32.mrb[0].mxu0
    %v212 = vpop.f32.mrb[0].mxu0
    %v213 = vpop.f32.mrb[0].mxu0
    %214 = vdwg.mxu0
    %v215 = vpack.c.bf16 %v210, %v210
    %v216 = vld [vmem:[#allocation2] sm:$0xff]
    %v217 = vld [vmem:[#allocation2 + $0x8] sm:$0xff]
    %v218 = vld [vmem:[#allocation2 + $0x10] sm:$0xff]
    %v219 = vld [vmem:[#allocation2 + $0x18] sm:$0xf]
    %v220 = vld [vmem:[#allocation2 + $0x1c] sm:$0xff]
    %v221 = vld [vmem:[#allocation2 + $0x24] sm:$0xff]
    %v222 = vld [vmem:[#allocation2 + $0x2c] sm:$0xff]
    %v223 = vld [vmem:[#allocation2 + $0x34] sm:$0xf]
    %v224 = vld [vmem:[#allocation2 + $0x38] sm:$0xff]
    %v225 = vld [vmem:[#allocation2 + $0x40] sm:$0xff]
    %v226 = vld [vmem:[#allocation2 + $0x48] sm:$0xff]
    %v227 = vld [vmem:[#allocation2 + $0x50] sm:$0xf]
    %v228 = vld [vmem:[#allocation2 + $0x54] sm:$0xff]
    %v229 = vld [vmem:[#allocation2 + $0x5c] sm:$0xff]
    %v230 = vld [vmem:[#allocation2 + $0x64] sm:$0xff]
    %v231 = vld [vmem:[#allocation2 + $0x6c] sm:$0xf]
    %v232 = vld [vmem:[%s6] sm:$0x7f]
    %v234 = vlaneseq
    %v235 = vshrl.u32 %v234, 7
    %v236 = vsub.s32 0, %v235
    %v237 = vrot.slane %v232, %v236
    %v238 = vlaneseq
    %v239 = vshrl.u32 %v238, 7
    %v240 = vsub.s32 1, %v239
    %v241 = vrot.slane %v232, %v240
    %v242 = vlaneseq
    %v243 = vshrl.u32 %v242, 7
    %v244 = vsub.s32 2, %v243
    %v245 = vrot.slane %v232, %v244
    %v246 = vlaneseq
    %v247 = vshrl.u32 %v246, 7
    %v248 = vsub.s32 3, %v247
    %v249 = vrot.slane %v232, %v248
    %v250 = vlaneseq
    %v251 = vshrl.u32 %v250, 7
    %v252 = vsub.s32 4, %v251
    %v253 = vrot.slane %v232, %v252
    %v254 = vlaneseq
    %v255 = vshrl.u32 %v254, 7
    %v256 = vsub.s32 5, %v255
    %v257 = vrot.slane %v232, %v256
    %v258 = vlaneseq
    %v259 = vshrl.u32 %v258, 7
    %v260 = vsub.s32 6, %v259
    %v261 = vrot.slane %v232, %v260
    %v285 = vunpack.c.l.b16 %v216
    %v286 = vunpack.c.h.b16 %v216
    %v287 = vunpack.c.l.b16 %v217
    %v288 = vunpack.c.h.b16 %v217
    %v289 = vunpack.c.l.b16 %v218
    %v290 = vunpack.c.h.b16 %v218
    %v291 = vunpack.c.l.b16 %v219
    %v292 = vunpack.c.l.b16 %v220
    %v293 = vunpack.c.h.b16 %v220
    %v294 = vunpack.c.l.b16 %v221
    %v295 = vunpack.c.h.b16 %v221
    %v296 = vunpack.c.l.b16 %v222
    %v297 = vunpack.c.h.b16 %v222
    %v298 = vunpack.c.l.b16 %v223
    %v299 = vunpack.c.l.b16 %v224
    %v300 = vunpack.c.h.b16 %v224
    %v301 = vunpack.c.l.b16 %v225
    %v302 = vunpack.c.h.b16 %v225
    %v303 = vunpack.c.l.b16 %v226
    %v304 = vunpack.c.h.b16 %v226
    %v305 = vunpack.c.l.b16 %v227
    %v306 = vunpack.c.l.b16 %v228
    %v307 = vunpack.c.h.b16 %v228
    %v308 = vunpack.c.l.b16 %v229
    %v309 = vunpack.c.h.b16 %v229
    %v310 = vunpack.c.l.b16 %v230
    %v311 = vunpack.c.h.b16 %v230
    %v312 = vunpack.c.l.b16 %v231
    %v313 = vpack.c.b16 %v292, %v285
    %v314 = vpack.c.b16 %v293, %v286
    %v315 = vpack.c.b16 %v294, %v287
    %v316 = vpack.c.b16 %v295, %v288
    %v317 = vpack.c.b16 %v296, %v289
    %v318 = vpack.c.b16 %v297, %v290
    %v319 = vpack.c.b16 %v298, %v291
    %v320 = vpack.c.b16 %v306, %v299
    %v321 = vpack.c.b16 %v307, %v300
    %v322 = vpack.c.b16 %v308, %v301
    %v323 = vpack.c.b16 %v309, %v302
    %v324 = vpack.c.b16 %v310, %v303
    %v325 = vpack.c.b16 %v311, %v304
    %v326 = vpack.c.b16 %v312, %v305
    %v342 = vsel %vm87, %v215, 0
    %344 = vmatprep.subr.bf16.mxu0 %v314
    %345 = vmatpush1.bf16.msra.mxu0 %v313
    %346 = vmatprep.subr.bf16.mxu0 %v321
    %347 = vmatpush1.bf16.msra.mxu0 %v320
    %348 = vmatprep.subr.bf16.mxu0 0
    %349 = vmatpush1.bf16.msra.mxu0 0
    %350 = vmatprep.subr.bf16.mxu0 0
    %351 = vmatpush1.bf16.msra.mxu0 0
    %352 = vmatprep.subr.bf16.mxu0 0
    %353 = vmatpush1.bf16.msra.mxu0 0
    %354 = vmatprep.subr.bf16.mxu0 0
    %355 = vmatpush1.bf16.msra.mxu0 0
    %356 = vmatprep.subr.bf16.mxu0 0
    %357 = vmatpush1.bf16.msra.mxu0 0
    %358 = vmatprep.subr.bf16.mxu0 0
    %359 = vmatpush1.bf16.msra.mxu0 0
    %360 = vmatprep.subr.bf16.mxu0 0
    %361 = vmatpush1.bf16.msra.mxu0 0
    %362 = vmatprep.subr.bf16.mxu0 0
    %363 = vmatpush1.bf16.msra.mxu0 0
    %364 = vmatprep.subr.bf16.mxu0 0
    %365 = vmatpush1.bf16.msra.mxu0 0
    %366 = vmatprep.subr.bf16.mxu0 0
    %367 = vmatpush1.bf16.msra.mxu0 0
    %368 = vmatprep.subr.bf16.mxu0 0
    %369 = vmatpush1.bf16.msra.mxu0 0
    %370 = vmatprep.subr.bf16.mxu0 0
    %371 = vmatpush1.bf16.msra.mxu0 0
    %372 = vmatprep.subr.bf16.mxu0 0
    %373 = vmatpush1.bf16.msra.mxu0 0
    %374 = vmatprep.subr.bf16.mxu0 0
    %375 = vmatpush1.bf16.msra.mxu0 0
    %376 = vmatprep.mubr.bf16.mxu0 0
    %377 = vmatmul.mubr.bf16.gmra.mrb[0].mxu0 %v342
    %v378 = vpop.f32.mrb[0].mxu0
    %v379 = vadd.f32 %v237, %v378
    %v380 = vpop.f32.mrb[0].mxu0
    %v381 = vadd.f32 %v241, %v380
    %v382 = vpop.f32.mrb[0].mxu0
    %v383 = vpop.f32.mrb[0].mxu0
    %384 = vdwg.mxu0
    %385 = vmatprep.subr.bf16.mxu0 %v316
    %386 = vmatpush1.bf16.msra.mxu0 %v315
    %387 = vmatprep.subr.bf16.mxu0 %v323
    %388 = vmatpush1.bf16.msra.mxu0 %v322
    %389 = vmatprep.subr.bf16.mxu0 0
    %390 = vmatpush1.bf16.msra.mxu0 0
    %391 = vmatprep.subr.bf16.mxu0 0
    %392 = vmatpush1.bf16.msra.mxu0 0
    %393 = vmatprep.subr.bf16.mxu0 0
    %394 = vmatpush1.bf16.msra.mxu0 0
    %395 = vmatprep.subr.bf16.mxu0 0
    %396 = vmatpush1.bf16.msra.mxu0 0
    %397 = vmatprep.subr.bf16.mxu0 0
    %398 = vmatpush1.bf16.msra.mxu0 0
    %399 = vmatprep.subr.bf16.mxu0 0
    %400 = vmatpush1.bf16.msra.mxu0 0
    %401 = vmatprep.subr.bf16.mxu0 0
    %402 = vmatpush1.bf16.msra.mxu0 0
    %403 = vmatprep.subr.bf16.mxu0 0
    %404 = vmatpush1.bf16.msra.mxu0 0
    %405 = vmatprep.subr.bf16.mxu0 0
    %406 = vmatpush1.bf16.msra.mxu0 0
    %407 = vmatprep.subr.bf16.mxu0 0
    %408 = vmatpush1.bf16.msra.mxu0 0
    %409 = vmatprep.subr.bf16.mxu0 0
    %410 = vmatpush1.bf16.msra.mxu0 0
    %411 = vmatprep.subr.bf16.mxu0 0
    %412 = vmatpush1.bf16.msra.mxu0 0
    %413 = vmatprep.subr.bf16.mxu0 0
    %414 = vmatpush1.bf16.msra.mxu0 0
    %415 = vmatprep.subr.bf16.mxu0 0
    %416 = vmatpush1.bf16.msra.mxu0 0
    %417 = vmatprep.mubr.bf16.mxu0 0
    %418 = vmatmul.mubr.bf16.gmra.mrb[0].mxu0 %v342
    %v419 = vpop.f32.mrb[0].mxu0
    %v420 = vadd.f32 %v245, %v419
    %v421 = vpop.f32.mrb[0].mxu0
    %v422 = vadd.f32 %v249, %v421
    %v423 = vpop.f32.mrb[0].mxu0
    %v424 = vpop.f32.mrb[0].mxu0
    %425 = vdwg.mxu0
    %426 = vmatprep.subr.bf16.mxu0 %v318
    %427 = vmatpush1.bf16.msra.mxu0 %v317
    %428 = vmatprep.subr.bf16.mxu0 %v325
    %429 = vmatpush1.bf16.msra.mxu0 %v324
    %430 = vmatprep.subr.bf16.mxu0 0
    %431 = vmatpush1.bf16.msra.mxu0 0
    %432 = vmatprep.subr.bf16.mxu0 0
    %433 = vmatpush1.bf16.msra.mxu0 0
    %434 = vmatprep.subr.bf16.mxu0 0
    %435 = vmatpush1.bf16.msra.mxu0 0
    %436 = vmatprep.subr.bf16.mxu0 0
    %437 = vmatpush1.bf16.msra.mxu0 0
    %438 = vmatprep.subr.bf16.mxu0 0
    %439 = vmatpush1.bf16.msra.mxu0 0
    %440 = vmatprep.subr.bf16.mxu0 0
    %441 = vmatpush1.bf16.msra.mxu0 0
    %442 = vmatprep.subr.bf16.mxu0 0
    %443 = vmatpush1.bf16.msra.mxu0 0
    %444 = vmatprep.subr.bf16.mxu0 0
    %445 = vmatpush1.bf16.msra.mxu0 0
    %446 = vmatprep.subr.bf16.mxu0 0
    %447 = vmatpush1.bf16.msra.mxu0 0
    %448 = vmatprep.subr.bf16.mxu0 0
    %449 = vmatpush1.bf16.msra.mxu0 0
    %450 = vmatprep.subr.bf16.mxu0 0
    %451 = vmatpush1.bf16.msra.mxu0 0
    %452 = vmatprep.subr.bf16.mxu0 0
    %453 = vmatpush1.bf16.msra.mxu0 0
    %454 = vmatprep.subr.bf16.mxu0 0
    %455 = vmatpush1.bf16.msra.mxu0 0
    %456 = vmatprep.subr.bf16.mxu0 0
    %457 = vmatpush1.bf16.msra.mxu0 0
    %458 = vmatprep.mubr.bf16.mxu0 0
    %459 = vmatmul.mubr.bf16.gmra.mrb[0].mxu0 %v342
    %v460 = vpop.f32.mrb[0].mxu0
    %v461 = vadd.f32 %v253, %v460
    %v462 = vpop.f32.mrb[0].mxu0
    %v463 = vadd.f32 %v257, %v462
    %v464 = vpop.f32.mrb[0].mxu0
    %v465 = vpop.f32.mrb[0].mxu0
    %466 = vdwg.mxu0
    %467 = vmatprep.subr.bf16.mxu0 0
    %468 = vmatpush1.bf16.msra.mxu0 %v319
    %469 = vmatprep.subr.bf16.mxu0 0
    %470 = vmatpush1.bf16.msra.mxu0 %v326
    %471 = vmatprep.subr.bf16.mxu0 0
    %472 = vmatpush1.bf16.msra.mxu0 0
    %473 = vmatprep.subr.bf16.mxu0 0
    %474 = vmatpush1.bf16.msra.mxu0 0
    %475 = vmatprep.subr.bf16.mxu0 0
    %476 = vmatpush1.bf16.msra.mxu0 0
    %477 = vmatprep.subr.bf16.mxu0 0
    %478 = vmatpush1.bf16.msra.mxu0 0
    %479 = vmatprep.subr.bf16.mxu0 0
    %480 = vmatpush1.bf16.msra.mxu0 0
    %481 = vmatprep.subr.bf16.mxu0 0
    %482 = vmatpush1.bf16.msra.mxu0 0
    %483 = vmatprep.subr.bf16.mxu0 0
    %484 = vmatpush1.bf16.msra.mxu0 0
    %485 = vmatprep.subr.bf16.mxu0 0
    %486 = vmatpush1.bf16.msra.mxu0 0
    %487 = vmatprep.subr.bf16.mxu0 0
    %488 = vmatpush1.bf16.msra.mxu0 0
    %489 = vmatprep.subr.bf16.mxu0 0
    %490 = vmatpush1.bf16.msra.mxu0 0
    %491 = vmatprep.subr.bf16.mxu0 0
    %492 = vmatpush1.bf16.msra.mxu0 0
    %493 = vmatprep.subr.bf16.mxu0 0
    %494 = vmatpush1.bf16.msra.mxu0 0
    %495 = vmatprep.subr.bf16.mxu0 0
    %496 = vmatpush1.bf16.msra.mxu0 0
    %497 = vmatprep.subr.bf16.mxu0 0
    %498 = vmatpush1.bf16.msra.mxu0 0
    %499 = vmatprep.mubr.bf16.mxu0 0
    %500 = vmatmul.mubr.bf16.gmra.mrb[0].mxu0 %v342
    %v501 = vpop.f32.mrb[0].mxu0
    %v502 = vadd.f32 %v261, %v501
    %v503 = vpop.f32.mrb[0].mxu0
    %v504 = vpop.f32.mrb[0].mxu0
    %v505 = vpop.f32.mrb[0].mxu0
    %506 = vdwg.mxu0
    %v507 = vld [vmem:[#allocation5] sm:$0xff]
    %v508 = vld [vmem:[#allocation5 + $0x8] sm:$0xff]
    %v509 = vld [vmem:[#allocation5 + $0x10] sm:$0xff]
    %v510 = vld [vmem:[#allocation5 + $0x18] sm:$0xf]
    %v511 = vld [vmem:[#allocation5 + $0x1c] sm:$0xff]
    %v512 = vld [vmem:[#allocation5 + $0x24] sm:$0xff]
    %v513 = vld [vmem:[#allocation5 + $0x2c] sm:$0xff]
    %v514 = vld [vmem:[#allocation5 + $0x34] sm:$0xf]
    %v515 = vld [vmem:[#allocation5 + $0x38] sm:$0xff]
    %v516 = vld [vmem:[#allocation5 + $0x40] sm:$0xff]
    %v517 = vld [vmem:[#allocation5 + $0x48] sm:$0xff]
    %v518 = vld [vmem:[#allocation5 + $0x50] sm:$0xf]
    %v519 = vld [vmem:[#allocation5 + $0x54] sm:$0xff]
    %v520 = vld [vmem:[#allocation5 + $0x5c] sm:$0xff]
    %v521 = vld [vmem:[#allocation5 + $0x64] sm:$0xff]
    %v522 = vld [vmem:[#allocation5 + $0x6c] sm:$0xf]
    %v523 = vld [vmem:[%s8] sm:$0x7f]
    %v525 = vlaneseq
    %v526 = vshrl.u32 %v525, 7
    %v527 = vsub.s32 0, %v526
    %v528 = vrot.slane %v523, %v527
    %v529 = vlaneseq
    %v530 = vshrl.u32 %v529, 7
    %v531 = vsub.s32 1, %v530
    %v532 = vrot.slane %v523, %v531
    %v533 = vlaneseq
    %v534 = vshrl.u32 %v533, 7
    %v535 = vsub.s32 2, %v534
    %v536 = vrot.slane %v523, %v535
    %v537 = vlaneseq
    %v538 = vshrl.u32 %v537, 7
    %v539 = vsub.s32 3, %v538
    %v540 = vrot.slane %v523, %v539
    %v541 = vlaneseq
    %v542 = vshrl.u32 %v541, 7
    %v543 = vsub.s32 4, %v542
    %v544 = vrot.slane %v523, %v543
    %v545 = vlaneseq
    %v546 = vshrl.u32 %v545, 7
    %v547 = vsub.s32 5, %v546
    %v548 = vrot.slane %v523, %v547
    %v549 = vlaneseq
    %v550 = vshrl.u32 %v549, 7
    %v551 = vsub.s32 6, %v550
    %v552 = vrot.slane %v523, %v551
    %v576 = vunpack.c.l.b16 %v507
    %v577 = vunpack.c.h.b16 %v507
    %v578 = vunpack.c.l.b16 %v508
    %v579 = vunpack.c.h.b16 %v508
    %v580 = vunpack.c.l.b16 %v509
    %v581 = vunpack.c.h.b16 %v509
    %v582 = vunpack.c.l.b16 %v510
    %v583 = vunpack.c.l.b16 %v511
    %v584 = vunpack.c.h.b16 %v511
    %v585 = vunpack.c.l.b16 %v512
    %v586 = vunpack.c.h.b16 %v512
    %v587 = vunpack.c.l.b16 %v513
    %v588 = vunpack.c.h.b16 %v513
    %v589 = vunpack.c.l.b16 %v514
    %v590 = vunpack.c.l.b16 %v515
    %v591 = vunpack.c.h.b16 %v515
    %v592 = vunpack.c.l.b16 %v516
    %v593 = vunpack.c.h.b16 %v516
    %v594 = vunpack.c.l.b16 %v517
    %v595 = vunpack.c.h.b16 %v517
    %v596 = vunpack.c.l.b16 %v518
    %v597 = vunpack.c.l.b16 %v519
    %v598 = vunpack.c.h.b16 %v519
    %v599 = vunpack.c.l.b16 %v520
    %v600 = vunpack.c.h.b16 %v520
    %v601 = vunpack.c.l.b16 %v521
    %v602 = vunpack.c.h.b16 %v521
    %v603 = vunpack.c.l.b16 %v522
    %v604 = vpack.c.b16 %v583, %v576
    %v605 = vpack.c.b16 %v584, %v577
    %v606 = vpack.c.b16 %v585, %v578
    %v607 = vpack.c.b16 %v586, %v579
    %v608 = vpack.c.b16 %v587, %v580
    %v609 = vpack.c.b16 %v588, %v581
    %v610 = vpack.c.b16 %v589, %v582
    %v611 = vpack.c.b16 %v597, %v590
    %v612 = vpack.c.b16 %v598, %v591
    %v613 = vpack.c.b16 %v599, %v592
    %v614 = vpack.c.b16 %v600, %v593
    %v615 = vpack.c.b16 %v601, %v594
    %v616 = vpack.c.b16 %v602, %v595
    %v617 = vpack.c.b16 %v603, %v596
    %632 = vmatprep.subr.bf16.mxu0 %v605
    %633 = vmatpush1.bf16.msra.mxu0 %v604
    %634 = vmatprep.subr.bf16.mxu0 %v612
    %635 = vmatpush1.bf16.msra.mxu0 %v611
    %636 = vmatprep.subr.bf16.mxu0 0
    %637 = vmatpush1.bf16.msra.mxu0 0
    %638 = vmatprep.subr.bf16.mxu0 0
    %639 = vmatpush1.bf16.msra.mxu0 0
    %640 = vmatprep.subr.bf16.mxu0 0
    %641 = vmatpush1.bf16.msra.mxu0 0
    %642 = vmatprep.subr.bf16.mxu0 0
    %643 = vmatpush1.bf16.msra.mxu0 0
    %644 = vmatprep.subr.bf16.mxu0 0
    %645 = vmatpush1.bf16.msra.mxu0 0
    %646 = vmatprep.subr.bf16.mxu0 0
    %647 = vmatpush1.bf16.msra.mxu0 0
    %648 = vmatprep.subr.bf16.mxu0 0
    %649 = vmatpush1.bf16.msra.mxu0 0
    %650 = vmatprep.subr.bf16.mxu0 0
    %651 = vmatpush1.bf16.msra.mxu0 0
    %652 = vmatprep.subr.bf16.mxu0 0
    %653 = vmatpush1.bf16.msra.mxu0 0
    %654 = vmatprep.subr.bf16.mxu0 0
    %655 = vmatpush1.bf16.msra.mxu0 0
    %656 = vmatprep.subr.bf16.mxu0 0
    %657 = vmatpush1.bf16.msra.mxu0 0
    %658 = vmatprep.subr.bf16.mxu0 0
    %659 = vmatpush1.bf16.msra.mxu0 0
    %660 = vmatprep.subr.bf16.mxu0 0
    %661 = vmatpush1.bf16.msra.mxu0 0
    %662 = vmatprep.subr.bf16.mxu0 0
    %663 = vmatpush1.bf16.msra.mxu0 0
    %664 = vmatprep.mubr.bf16.mxu0 0
    %665 = vmatmul.mubr.bf16.gmra.mrb[0].mxu0 %v342
    %v666 = vpop.f32.mrb[0].mxu0
    %v667 = vadd.f32 %v528, %v666
    %v668 = vpop.f32.mrb[0].mxu0
    %v669 = vadd.f32 %v532, %v668
    %v670 = vpop.f32.mrb[0].mxu0
    %v671 = vpop.f32.mrb[0].mxu0
    %672 = vdwg.mxu0
    %673 = vmatprep.subr.bf16.mxu0 %v607
    %674 = vmatpush1.bf16.msra.mxu0 %v606
    %675 = vmatprep.subr.bf16.mxu0 %v614
    %676 = vmatpush1.bf16.msra.mxu0 %v613
    %677 = vmatprep.subr.bf16.mxu0 0
    %678 = vmatpush1.bf16.msra.mxu0 0
    %679 = vmatprep.subr.bf16.mxu0 0
    %680 = vmatpush1.bf16.msra.mxu0 0
    %681 = vmatprep.subr.bf16.mxu0 0
    %682 = vmatpush1.bf16.msra.mxu0 0
    %683 = vmatprep.subr.bf16.mxu0 0
    %684 = vmatpush1.bf16.msra.mxu0 0
    %685 = vmatprep.subr.bf16.mxu0 0
    %686 = vmatpush1.bf16.msra.mxu0 0
    %687 = vmatprep.subr.bf16.mxu0 0
    %688 = vmatpush1.bf16.msra.mxu0 0
    %689 = vmatprep.subr.bf16.mxu0 0
    %690 = vmatpush1.bf16.msra.mxu0 0
    %691 = vmatprep.subr.bf16.mxu0 0
    %692 = vmatpush1.bf16.msra.mxu0 0
    %693 = vmatprep.subr.bf16.mxu0 0
    %694 = vmatpush1.bf16.msra.mxu0 0
    %695 = vmatprep.subr.bf16.mxu0 0
    %696 = vmatpush1.bf16.msra.mxu0 0
    %697 = vmatprep.subr.bf16.mxu0 0
    %698 = vmatpush1.bf16.msra.mxu0 0
    %699 = vmatprep.subr.bf16.mxu0 0
    %700 = vmatpush1.bf16.msra.mxu0 0
    %701 = vmatprep.subr.bf16.mxu0 0
    %702 = vmatpush1.bf16.msra.mxu0 0
    %703 = vmatprep.subr.bf16.mxu0 0
    %704 = vmatpush1.bf16.msra.mxu0 0
    %705 = vmatprep.mubr.bf16.mxu0 0
    %706 = vmatmul.mubr.bf16.gmra.mrb[0].mxu0 %v342
    %v707 = vpop.f32.mrb[0].mxu0
    %v708 = vadd.f32 %v536, %v707
    %v709 = vpop.f32.mrb[0].mxu0
    %v710 = vadd.f32 %v540, %v709
    %v711 = vpop.f32.mrb[0].mxu0
    %v712 = vpop.f32.mrb[0].mxu0
    %713 = vdwg.mxu0
    %714 = vmatprep.subr.bf16.mxu0 %v609
    %715 = vmatpush1.bf16.msra.mxu0 %v608
    %716 = vmatprep.subr.bf16.mxu0 %v616
    %717 = vmatpush1.bf16.msra.mxu0 %v615
    %718 = vmatprep.subr.bf16.mxu0 0
    %719 = vmatpush1.bf16.msra.mxu0 0
    %720 = vmatprep.subr.bf16.mxu0 0
    %721 = vmatpush1.bf16.msra.mxu0 0
    %722 = vmatprep.subr.bf16.mxu0 0
    %723 = vmatpush1.bf16.msra.mxu0 0
    %724 = vmatprep.subr.bf16.mxu0 0
    %725 = vmatpush1.bf16.msra.mxu0 0
    %726 = vmatprep.subr.bf16.mxu0 0
    %727 = vmatpush1.bf16.msra.mxu0 0
    %728 = vmatprep.subr.bf16.mxu0 0
    %729 = vmatpush1.bf16.msra.mxu0 0
    %730 = vmatprep.subr.bf16.mxu0 0
    %731 = vmatpush1.bf16.msra.mxu0 0
    %732 = vmatprep.subr.bf16.mxu0 0
    %733 = vmatpush1.bf16.msra.mxu0 0
    %734 = vmatprep.subr.bf16.mxu0 0
    %735 = vmatpush1.bf16.msra.mxu0 0
    %736 = vmatprep.subr.bf16.mxu0 0
    %737 = vmatpush1.bf16.msra.mxu0 0
    %738 = vmatprep.subr.bf16.mxu0 0
    %739 = vmatpush1.bf16.msra.mxu0 0
    %740 = vmatprep.subr.bf16.mxu0 0
    %741 = vmatpush1.bf16.msra.mxu0 0
    %742 = vmatprep.subr.bf16.mxu0 0
    %743 = vmatpush1.bf16.msra.mxu0 0
    %744 = vmatprep.subr.bf16.mxu0 0
    %745 = vmatpush1.bf16.msra.mxu0 0
    %746 = vmatprep.mubr.bf16.mxu0 0
    %747 = vmatmul.mubr.bf16.gmra.mrb[0].mxu0 %v342
    %v748 = vpop.f32.mrb[0].mxu0
    %v749 = vadd.f32 %v544, %v748
    %v750 = vpop.f32.mrb[0].mxu0
    %v751 = vadd.f32 %v548, %v750
    %v752 = vpop.f32.mrb[0].mxu0
    %v753 = vpop.f32.mrb[0].mxu0
    %754 = vdwg.mxu0
    %755 = vmatprep.subr.bf16.mxu0 0
    %756 = vmatpush1.bf16.msra.mxu0 %v610
    %757 = vmatprep.subr.bf16.mxu0 0
    %758 = vmatpush1.bf16.msra.mxu0 %v617
    %759 = vmatprep.subr.bf16.mxu0 0
    %760 = vmatpush1.bf16.msra.mxu0 0
    %761 = vmatprep.subr.bf16.mxu0 0
    %762 = vmatpush1.bf16.msra.mxu0 0
    %763 = vmatprep.subr.bf16.mxu0 0
    %764 = vmatpush1.bf16.msra.mxu0 0
    %765 = vmatprep.subr.bf16.mxu0 0
    %766 = vmatpush1.bf16.msra.mxu0 0
    %767 = vmatprep.subr.bf16.mxu0 0
    %768 = vmatpush1.bf16.msra.mxu0 0
    %769 = vmatprep.subr.bf16.mxu0 0
    %770 = vmatpush1.bf16.msra.mxu0 0
    %771 = vmatprep.subr.bf16.mxu0 0
    %772 = vmatpush1.bf16.msra.mxu0 0
    %773 = vmatprep.subr.bf16.mxu0 0
    %774 = vmatpush1.bf16.msra.mxu0 0
    %775 = vmatprep.subr.bf16.mxu0 0
    %776 = vmatpush1.bf16.msra.mxu0 0
    %777 = vmatprep.subr.bf16.mxu0 0
    %778 = vmatpush1.bf16.msra.mxu0 0
    %779 = vmatprep.subr.bf16.mxu0 0
    %780 = vmatpush1.bf16.msra.mxu0 0
    %781 = vmatprep.subr.bf16.mxu0 0
    %782 = vmatpush1.bf16.msra.mxu0 0
    %783 = vmatprep.subr.bf16.mxu0 0
    %784 = vmatpush1.bf16.msra.mxu0 0
    %785 = vmatprep.subr.bf16.mxu0 0
    %786 = vmatpush1.bf16.msra.mxu0 0
    %787 = vmatprep.mubr.bf16.mxu0 0
    %788 = vmatmul.mubr.bf16.gmra.mrb[0].mxu0 %v342
    %v789 = vpop.f32.mrb[0].mxu0
    %v790 = vadd.f32 %v552, %v789
    %v791 = vpop.f32.mrb[0].mxu0
    %v792 = vpop.f32.mrb[0].mxu0
    %v793 = vpop.f32.mrb[0].mxu0
    %794 = vdwg.mxu0
    %v795 = vxor.u32 %v667, 2147483648
    %v796 = vxor.u32 %v669, 2147483648
    %v797 = vxor.u32 %v708, 2147483648
    %v798 = vxor.u32 %v710, 2147483648
    %v799 = vxor.u32 %v749, 2147483648
    %v800 = vxor.u32 %v751, 2147483648
    %v801 = vxor.u32 %v790, 2147483648
    %v802 = vmul.f32 %v795, 1.442695
    %v803 = vpow.pop %v802
    %v804 = vmul.f32 %v796, 1.442695
    %v805 = vpow.pop %v804
    %v806 = vmul.f32 %v797, 1.442695
    %v807 = vpow.pop %v806
    %v808 = vmul.f32 %v798, 1.442695
    %v809 = vpow.pop %v808
    %v810 = vmul.f32 %v799, 1.442695
    %v811 = vpow.pop %v810
    %v812 = vmul.f32 %v800, 1.442695
    %v813 = vpow.pop %v812
    %v814 = vmul.f32 %v801, 1.442695
    %v815 = vpow.pop %v814
    %v816 = vadd.f32 %v803, 1.0
    %v817 = vadd.f32 %v805, 1.0
    %v818 = vadd.f32 %v807, 1.0
    %v819 = vadd.f32 %v809, 1.0
    %v820 = vadd.f32 %v811, 1.0
    %v821 = vadd.f32 %v813, 1.0
    %v822 = vadd.f32 %v815, 1.0
    %v823 = vrcp.pop %v816
    %v824 = vmul.f32 1.0, %v823
    %v825 = vrcp.pop %v817
    %v826 = vmul.f32 1.0, %v825
    %v827 = vrcp.pop %v818
    %v828 = vmul.f32 1.0, %v827
    %v829 = vrcp.pop %v819
    %v830 = vmul.f32 1.0, %v829
    %v831 = vrcp.pop %v820
    %v832 = vmul.f32 1.0, %v831
    %v833 = vrcp.pop %v821
    %v834 = vmul.f32 1.0, %v833
    %v835 = vrcp.pop %v822
    %v836 = vmul.f32 1.0, %v835
    %v837 = vmul.f32 %v379, %v824
    %v838 = vmul.f32 %v381, %v826
    %v839 = vmul.f32 %v420, %v828
    %v840 = vmul.f32 %v422, %v830
    %v841 = vmul.f32 %v461, %v832
    %v842 = vmul.f32 %v463, %v834
    %v843 = vmul.f32 %v502, %v836
    %v844 = vpack.c.bf16 %v837, %v837
    %v845 = vpack.c.bf16 %v838, %v838
    %v846 = vpack.c.bf16 %v839, %v839
    %v847 = vpack.c.bf16 %v840, %v840
    %v848 = vpack.c.bf16 %v841, %v841
    %v849 = vpack.c.bf16 %v842, %v842
    %v850 = vpack.c.bf16 %v843, %v843
    %v858 = vcombine.low %v844, %v845
    %v859 = vcombine.low %v846, %v847
    %v860 = vcombine.low %v848, %v849
    %v862 = vunpack.c.l.s4 1966171168
    %v863 = vunpack.c.0.s8 %v862
    %v864 = vlaneseq
    %v865 = vshrl.u32 %v864, 7
    %v866 = vsub.s32 %v863, %v865
    %v867 = vrot.slane %v858, %v866
    %v869 = vunpack.c.l.s4 1966171168
    %v870 = vunpack.c.0.s8 %v869
    %v871 = vlaneseq
    %v872 = vshrl.u32 %v871, 7
    %v873 = vsub.s32 %v870, %v872
    %v874 = vrot.slane %v859, %v873
    %v876 = vunpack.c.l.s4 1966171168
    %v877 = vunpack.c.0.s8 %v876
    %v878 = vlaneseq
    %v879 = vshrl.u32 %v878, 7
    %v880 = vsub.s32 %v877, %v879
    %v881 = vrot.slane %v860, %v880
    %v883 = vunpack.c.l.s4 1966171168
    %v884 = vunpack.c.0.s8 %v883
    %v885 = vlaneseq
    %v886 = vshrl.u32 %v885, 7
    %v887 = vsub.s32 %v884, %v886
    %v888 = vrot.slane %v850, %v887
    %v889 = vcombine.low %v867, %v874
    %v890 = vcombine.low %v881, %v888
    %v892 = vunpack.c.l.s4 1966171168
    %v893 = vunpack.c.0.s8 %v892
    %v894 = vlaneseq
    %v895 = vshrl.u32 %v894, 7
    %v896 = vsub.s32 %v893, %v895
    %v897 = vrot.slane %v889, %v896
    %v899 = vunpack.c.l.s4 1966171168
    %v900 = vunpack.c.0.s8 %v899
    %v901 = vlaneseq
    %v902 = vshrl.u32 %v901, 7
    %v903 = vsub.s32 %v900, %v902
    %v904 = vrot.slane %v890, %v903
    %v905 = vcombine.low %v897, %v904
    %vm907 = vcmask 1040384
    %vm908 = vcmask 1041409
    %vm909 = vmor %vm908, %vm907
    %vm910 = vcmask 1042434
    %vm911 = vmor %vm910, %vm909
    %vm912 = vcmask 1043459
    %vm913 = vmor %vm912, %vm911
    %vm914 = vcmask 1044484
    %vm915 = vmor %vm914, %vm913
    %vm916 = vcmask 1045509
    %vm917 = vmor %vm916, %vm915
    %vm918 = vcmask 129030
    %vm919 = vmor %vm918, %vm917
    %920 = vst.msk [vmem:[#allocation7] sm:$0x7f] %vm919, %v905
    // Predicated region
    $region46: #{tpu_custom_call.1} parent=1 // pred_check
      _
    $region47: #{tpu_custom_call.1} parent=1 // pred_check_branch
      %922 = sbr.rel (0) target = $region49
    $region48: #{tpu_custom_call.1} parent=1 // pred_region
      %s924 = ssub.s32 112, 112
      %925 = vsyncadd [#allocation4], %s924
      %s927 = sshll.u32 [#allocation7], 4
      %s928 = int_to_ptr.vmem [resolvable:$true] %s927
      %930 = dma.vmem_to_hbm [thread:$0]  %s928, 112, %s9, [#allocation4]
    $region49: #{tpu_custom_call.1} parent=1 // pred_fallthru
      _
    // Predicated region
    $region50: #{tpu_custom_call.1} parent=1 // pred_check
      _
    $region51: #{tpu_custom_call.1} parent=1 // pred_check_branch
      %932 = sbr.rel (0) target = $region53
    $region52: #{tpu_custom_call.1} parent=1 // pred_region
      %933 = dma.done [#allocation4], 112
    $region53: #{tpu_custom_call.1} parent=1 // pred_fallthru
      _
    %934 = vsyncpa [#allocation3], 1
    %935 = vsyncpa [#allocation6], 1
    %936 = vsyncpa [#allocation4], 1

</llo_original>
